<compile_context>
chip_gen: v5e
topology: v5e:2x2
jax: 0.10.0
libtpu: 0.0.40
codegen_flags: <defaults>
</compile_context>

<pallas_src>
import jax
import jax.numpy as jnp
from jax.experimental import pallas as pl
from jax.experimental.pallas import tpu as pltpu

N_OBS = 9
HID = 128

# Packed-parameter layout (rows of a (P_ROWS, 128) buffer):
W1_OFF = 0      # rows   0:128 : rows 0:9 = W1, row 9 = b1 (picked up by ones column), rest 0
W2_OFF = 128    # rows 128:256 : W2
W3_OFF = 256    # rows 256:384 : W3 zero-padded to 128 output columns
B2_ROW = 384    # row  384     : b2
B3_ROW = 392    # row  392     : b3 zero-padded to 128 columns
P_ROWS = 400    # multiple of 8 -> tile-aligned static slices


def dqn_kernel(x_ref, p_ref, o_ref):
    cdt = p_ref.dtype                                   # bf16 compute dtype for MXU
    x = x_ref[...].astype(cdt)                          # (TB, 128) augmented input

    w1 = p_ref[W1_OFF:W1_OFF + HID, :]
    w2 = p_ref[W2_OFF:W2_OFF + HID, :]
    w3 = p_ref[W3_OFF:W3_OFF + HID, :]
    b2 = p_ref[B2_ROW:B2_ROW + 1, :].astype(jnp.float32)
    b3 = p_ref[B3_ROW:B3_ROW + 1, :].astype(jnp.float32)

    # layer 1 (+bias folded in via the ones column of x) + ReLU, f32 accumulation
    h1 = jnp.dot(x, w1, preferred_element_type=jnp.float32)
    h1 = jnp.maximum(h1, 0.0)
    # layer 2 + ReLU
    h2 = jnp.dot(h1.astype(cdt), w2, preferred_element_type=jnp.float32) + b2
    h2 = jnp.maximum(h2, 0.0)
    # layer 3 (lane-dense 128-wide padded output)
    out = jnp.dot(h2.astype(cdt), w3, preferred_element_type=jnp.float32) + b3
    o_ref[...] = out.astype(o_ref.dtype)


def pack_params(params, n_actions, dtype=jnp.bfloat16):
    """Pack (w1,b1,w2,b2,w3,b3) into a single lane-dense (P_ROWS, 128) buffer."""
    w1, b1, w2, b2, w3, b3 = params
    p = jnp.zeros((P_ROWS, HID), jnp.float32)
    p = p.at[W1_OFF:W1_OFF + N_OBS, :].set(w1)
    p = p.at[W1_OFF + N_OBS, :].set(b1)            # bias1 row (augmented-matrix trick)
    p = p.at[W2_OFF:W2_OFF + HID, :].set(w2)
    p = p.at[W3_OFF:W3_OFF + HID, :n_actions].set(w3)
    p = p.at[B2_ROW, :].set(b2)
    p = p.at[B3_ROW, :n_actions].set(b3)
    return p.astype(dtype)


def dqn_forward(x, packed_params, n_actions, tb=128):
    B, n_obs = x.shape
    b_pad = ((B + tb - 1) // tb) * tb

    # Augmented, lane-dense input: features in cols [0, n_obs), ones column at
    # col n_obs (folds in bias1), zeros elsewhere; rows padded to a tile multiple.
    x_aug = jnp.zeros((b_pad, HID), jnp.float32)
    x_aug = x_aug.at[:B, :n_obs].set(x.astype(jnp.float32))
    x_aug = x_aug.at[:B, n_obs].set(1.0)

    out = pl.pallas_call(
        dqn_kernel,
        out_shape=jax.ShapeDtypeStruct((b_pad, HID), jnp.float32),
        grid_spec=pltpu.PrefetchScalarGridSpec(
            num_scalar_prefetch=0,
            grid=(b_pad // tb,),
            in_specs=[
                pl.BlockSpec((tb, HID), lambda i: (i, 0)),        # activations stream
                pl.BlockSpec((P_ROWS, HID), lambda i: (0, 0)),    # params VMEM-resident
            ],
            out_specs=pl.BlockSpec((tb, HID), lambda i: (i, 0)),
        ),
        compiler_params=pltpu.CompilerParams(
            dimension_semantics=("parallel",)),
    )(x_aug, packed_params)
    return out[:B, :n_actions]


def init_linear(key, fan_in, fan_out, dtype=jnp.float32):
    # Mirrors PyTorch nn.Linear default init: U(-1/sqrt(fan_in), 1/sqrt(fan_in))
    kw, kb = jax.random.split(key)
    bound = 1.0 / float(fan_in) ** 0.5
    w = jax.random.uniform(kw, (fan_in, fan_out), dtype, -bound, bound)
    b = jax.random.uniform(kb, (fan_out,), dtype, -bound, bound)
    return w, b


def reference_forward(x, params):
    # Mimics the kernel's numerics: bf16 MXU operands, f32 accumulation,
    # f32 bias-add / ReLU.
    w1, b1, w2, b2, w3, b3 = [p.astype(jnp.bfloat16) for p in params]
    f32 = jnp.float32
    h = jnp.dot(x.astype(jnp.bfloat16), w1, preferred_element_type=f32) + b1.astype(f32)
    h = jnp.maximum(h, 0.0)
    h = jnp.dot(h.astype(jnp.bfloat16), w2, preferred_element_type=f32) + b2.astype(f32)
    h = jnp.maximum(h, 0.0)
    return jnp.dot(h.astype(jnp.bfloat16), w3, preferred_element_type=f32) + b3.astype(f32)


if __name__ == "__main__":
    n_actions = 4      # len(env.actions) stand-in
    batch = 200        # exercises padding + a multi-step batch grid (pads to 256)

    key = jax.random.PRNGKey(0)
    kx, k1, k2, k3 = jax.random.split(key, 4)

    x = jax.random.normal(kx, (batch, N_OBS), jnp.float32)
    w1, b1 = init_linear(k1, N_OBS, HID)
    w2, b2 = init_linear(k2, HID, HID)
    w3, b3 = init_linear(k3, HID, n_actions)
    params = (w1, b1, w2, b2, w3, b3)

    packed = pack_params(params, n_actions)
    out = dqn_forward(x, packed, n_actions, tb=128)
    out = jax.block_until_ready(out)

    ref = reference_forward(x, params)
    assert out.shape == (batch, n_actions)
    assert jnp.allclose(out, ref, atol=1e-4, rtol=1e-4), float(jnp.max(jnp.abs(out - ref)))

    print("KERNEL_OK")
</pallas_src>

<mosaic_0001>
module attributes {stable_mosaic.version = 11 : i64} {
  func.func @dqn_kernel(%arg0: i32, %arg1: memref<128x128xf32, #tpu.memory_space<vmem>>, %arg2: memref<400x128xbf16, #tpu.memory_space<vmem>>, %arg3: memref<128x128xf32, #tpu.memory_space<vmem>>) attributes {dimension_semantics = [#tpu.dimension_semantics<parallel>], iteration_bounds = array<i64: 2>, scalar_prefetch = 0 : i64, scratch_operands = 0 : i64, tpu.core_type = #tpu.core_type<tc>, window_params = [{transform_indices = @transform_0, window_bounds = array<i64: 128, 128>}, {pipeline_mode = #tpu.pipeline_mode<synchronous>, transform_indices = @transform_1, window_bounds = array<i64: 400, 128>}, {transform_indices = @transform_2, window_bounds = array<i64: 128, 128>}]} {
    %c0 = arith.constant 0 : index
    %c0_0 = arith.constant 0 : index
    %0 = vector.load %arg1[%c0, %c0_0] : memref<128x128xf32, #tpu.memory_space<vmem>>, vector<128x128xf32>
    %1 = arith.truncf %0 : vector<128x128xf32> to vector<128x128xbf16>
    %c0_1 = arith.constant 0 : index
    %c0_2 = arith.constant 0 : index
    %2 = vector.load %arg2[%c0_1, %c0_2] : memref<400x128xbf16, #tpu.memory_space<vmem>>, vector<128x128xbf16>
    %c128 = arith.constant 128 : index
    %c0_3 = arith.constant 0 : index
    %3 = vector.load %arg2[%c128, %c0_3] : memref<400x128xbf16, #tpu.memory_space<vmem>>, vector<128x128xbf16>
    %c256 = arith.constant 256 : index
    %c0_4 = arith.constant 0 : index
    %4 = vector.load %arg2[%c256, %c0_4] : memref<400x128xbf16, #tpu.memory_space<vmem>>, vector<128x128xbf16>
    %c384 = arith.constant 384 : index
    %c0_5 = arith.constant 0 : index
    %5 = vector.load %arg2[%c384, %c0_5] : memref<400x128xbf16, #tpu.memory_space<vmem>>, vector<1x128xbf16>
    %6 = arith.extf %5 : vector<1x128xbf16> to vector<1x128xf32>
    %c392 = arith.constant 392 : index
    %c0_6 = arith.constant 0 : index
    %7 = vector.load %arg2[%c392, %c0_6] : memref<400x128xbf16, #tpu.memory_space<vmem>>, vector<1x128xbf16>
    %8 = arith.extf %7 : vector<1x128xbf16> to vector<1x128xf32>
    %cst = arith.constant dense<0.000000e+00> : vector<128x128xf32>
    %9 = tpu.matmul %1, %2, %cst {dimension_numbers = #tpu.dot_dimension_numbers<[1], [0], [0], [1], [0, 0, 1, 1], [], []>} : vector<128x128xbf16>, vector<128x128xbf16>, vector<128x128xf32> -> vector<128x128xf32>
    %cst_7 = arith.constant 0.000000e+00 : f32
    %10 = vector.broadcast %cst_7 : f32 to vector<128x128xf32>
    %11 = arith.maximumf %9, %10 : vector<128x128xf32>
    %12 = arith.truncf %11 : vector<128x128xf32> to vector<128x128xbf16>
    %cst_8 = arith.constant dense<0.000000e+00> : vector<128x128xf32>
    %13 = tpu.matmul %12, %3, %cst_8 {dimension_numbers = #tpu.dot_dimension_numbers<[1], [0], [0], [1], [0, 0, 1, 1], [], []>} : vector<128x128xbf16>, vector<128x128xbf16>, vector<128x128xf32> -> vector<128x128xf32>
    %14 = vector.broadcast %6 : vector<1x128xf32> to vector<128x128xf32>
    %15 = arith.addf %13, %14 : vector<128x128xf32>
    %cst_9 = arith.constant 0.000000e+00 : f32
    %16 = vector.broadcast %cst_9 : f32 to vector<128x128xf32>
    %17 = arith.maximumf %15, %16 : vector<128x128xf32>
    %18 = arith.truncf %17 : vector<128x128xf32> to vector<128x128xbf16>
    %cst_10 = arith.constant dense<0.000000e+00> : vector<128x128xf32>
    %19 = tpu.matmul %18, %4, %cst_10 {dimension_numbers = #tpu.dot_dimension_numbers<[1], [0], [0], [1], [0, 0, 1, 1], [], []>} : vector<128x128xbf16>, vector<128x128xbf16>, vector<128x128xf32> -> vector<128x128xf32>
    %20 = vector.broadcast %8 : vector<1x128xf32> to vector<128x128xf32>
    %21 = arith.addf %19, %20 : vector<128x128xf32>
    %c0_11 = arith.constant 0 : index
    %c0_12 = arith.constant 0 : index
    %22 = vector.load %arg3[%c0_11, %c0_12] : memref<128x128xf32, #tpu.memory_space<vmem>>, vector<128x128xf32>
    tpu.vector_store %arg3[%c0_11, %c0_12], %21 {strides = array<i32>} : memref<128x128xf32, #tpu.memory_space<vmem>>, vector<128x128xf32>,
    return
  }
  func.func @transform_0(%arg0: i32) -> (i32, i32) {
    %c0_i32 = arith.constant 0 : i32
    %c0_i32_0 = arith.constant 0 : i32
    return %arg0, %c0_i32 : i32, i32
  }
  func.func @transform_1(%arg0: i32) -> (i32, i32) {
    %c0_i32 = arith.constant 0 : i32
    %c0_i32_0 = arith.constant 0 : i32
    %c0_i32_1 = arith.constant 0 : i32
    return %c0_i32, %c0_i32_0 : i32, i32
  }
  func.func @transform_2(%arg0: i32) -> (i32, i32) {
    %c0_i32 = arith.constant 0 : i32
    %c0_i32_0 = arith.constant 0 : i32
    return %arg0, %c0_i32 : i32, i32
  }
}

</mosaic_0001>

<llo_original>
// kernel: tpu_custom_call.1
$region0: #{tpu_custom_call.1}
  #allocation0 [shape = 'u32[]', space=smem, size = 0x4, offset = 0x4, fixed_abs, tag = 'smem constant byte address 0x4 - core index']
  #allocation1 [shape = 'u32[72,128]{1,0:T(1,128)}', space=vmem, size = 0x9000, scoped, tag = 'internal scratch']
  %s0 = inlined_call_operand.hbm [shape: f32[256,128], index: 0, kind: input, shape index: {}]
  %s1 = inlined_call_operand.hbm [shape: bf16[400,128], index: 1, kind: input, shape index: {}]
  %s2 = inlined_call_operand.hbm [shape: f32[256,128], index: 2, kind: output, shape index: {}]
  %s3 = sld [smem:[#allocation0]]
  $region49: #{tpu_custom_call.1} parent=0
    _
  %s5 = ssub.s32 1, %s3
  %s6 = scalar_select 0, %s5, %s3
  $region1: #{tpu_custom_call.1} parent=0
    #allocation2 [shape = 'u8[131072]{0}', space=vmem, size = 0x20000, scoped, tag = 'input window, operand 0']
    #allocation3 [shape = 's32[2]{0}', space=sflag, size = 0x8, scoped, tag = 'scoped memory for tpu_custom_call.1']
    #allocation4 [shape = 's32[2]{0}', space=sflag, size = 0x8, scoped, tag = 'scoped memory for tpu_custom_call.1']
    #allocation5 [shape = 'u8[102400]{0}', space=vmem, size = 0x19000, scoped, tag = 'input window, operand 1, single buffered']
    #allocation6 [shape = 's32[1]{0}', space=sflag, size = 0x4, scoped, tag = 'scoped memory for tpu_custom_call.1']
    #allocation7 [shape = 'u8[131072]{0}', space=vmem, size = 0x20000, scoped, tag = 'output window, operand 0']
    %7 = vsyncpa [#allocation3], 0
    %s8 = scalar_lea.sflag [#allocation3], 1
    %9 = vsyncpa %s8, 0
    %10 = vsyncpa [#allocation6], 0
    %11 = vsyncpa [#allocation4], 0
    %s12 = scalar_lea.sflag [#allocation4], 1
    %13 = vsyncpa %s12, 0
    loop: start=0, step=1, limit=4
    $region2: #{tpu_custom_call.1} parent=1 // loop_pre_header
      _
    $region3: #{tpu_custom_call.1} parent=1 // loop_header
      %s15 = sphi 0, %s19
      %p16 = scmp.ge.s32.totalorder %s15, 4
      %s25 = sphi 0, %s27
      %s28 = sphi 0, %s25
      %s29 = sphi 0, %s28
      %s45 = sphi 0, %s29
      %s49 = sphi 0, %s49
      %s51 = sphi 0, %s49
      %s52 = sphi 0, %s51
      %s66 = sphi 0, %s52
      %s72 = sphi 0, %s74
      %s75 = sphi 0, %s72
      %s76 = sphi 0, %s75
      %s92 = sphi 0, %s76
    $region4: #{tpu_custom_call.1} parent=1 // loop_header_branch
      %18 = sbr.rel (%p16) target = $region8
    $region5: #{tpu_custom_call.1} parent=1 // loop_body
      %s20 = ssub.s32 %s15, 1
      %s21 = ssub.s32 %s15, 2
      %s22 = sadd.s32 %s15, 1
      %s23 = ssub.s32 %s15, %s22
      %p24 = scmp.eq.s32.totalorder %s23, 0
      %s26 = sadd.s32 %s25, 1
      %s27 = scalar_select %p24, %s25, %s26
      %p30 = pneg %p24
      %p31 = scmp.eq.s32.totalorder %s15, 1
      %p32 = por %p30, %p31
      %p33 = scmp.ne.s32.totalorder %s25, %s28
      %p34 = scmp.eq.s32.totalorder %s15, 0
      %p35 = por %p33, %p34
      %p36 = scmp.ne.s32.totalorder %s25, %s28
      %p37 = scmp.eq.s32.totalorder %s20, 1
      %p38 = por %p36, %p37
      %p39 = scmp.ne.s32.totalorder %s28, %s29
      %p40 = scmp.eq.s32.totalorder %s20, 0
      %p41 = por %p39, %p40
      %p42 = scmp.ne.s32.totalorder %s28, %s29
      %p43 = scmp.eq.s32.totalorder %s21, 1
      %p44 = por %p42, %p43
      %p46 = scmp.ne.s32.totalorder %s29, %s45
      %p47 = scmp.eq.s32.totalorder %s21, 0
      %p48 = por %p46, %p47
      %s50 = sadd.s32 %s49, 1
      %p53 = scmp.eq.s32.totalorder %s15, 1
      %p54 = scmp.ne.s32.totalorder %s49, %s51
      %p55 = scmp.eq.s32.totalorder %s15, 0
      %p56 = por %p54, %p55
      %p57 = scmp.ne.s32.totalorder %s49, %s51
      %p58 = scmp.eq.s32.totalorder %s20, 1
      %p59 = por %p57, %p58
      %p60 = scmp.ne.s32.totalorder %s51, %s52
      %p61 = scmp.eq.s32.totalorder %s20, 0
      %p62 = por %p60, %p61
      %p63 = scmp.ne.s32.totalorder %s51, %s52
      %p64 = scmp.eq.s32.totalorder %s21, 1
      %p65 = por %p63, %p64
      %p67 = scmp.ne.s32.totalorder %s52, %s66
      %p68 = scmp.eq.s32.totalorder %s21, 0
      %p69 = por %p67, %p68
      %s70 = ssub.s32 %s15, %s22
      %p71 = scmp.eq.s32.totalorder %s70, 0
      %s73 = sadd.s32 %s72, 1
      %s74 = scalar_select %p71, %s72, %s73
      %p77 = pneg %p71
      %p78 = scmp.eq.s32.totalorder %s15, 1
      %p79 = por %p77, %p78
      %p80 = scmp.ne.s32.totalorder %s72, %s75
      %p81 = scmp.eq.s32.totalorder %s15, 0
      %p82 = por %p80, %p81
      %p83 = scmp.ne.s32.totalorder %s72, %s75
      %p84 = scmp.eq.s32.totalorder %s20, 1
      %p85 = por %p83, %p84
      %p86 = scmp.ne.s32.totalorder %s75, %s76
      %p87 = scmp.eq.s32.totalorder %s20, 0
      %p88 = por %p86, %p87
      %p89 = scmp.ne.s32.totalorder %s75, %s76
      %p90 = scmp.eq.s32.totalorder %s21, 1
      %p91 = por %p89, %p90
      %p93 = scmp.ne.s32.totalorder %s76, %s92
      %p94 = scmp.eq.s32.totalorder %s21, 0
      %p95 = por %p93, %p94
      %p96 = scmp.le.s32.totalorder 1, %s15
      %p97 = scmp.lt.s32.totalorder %s15, 3
      %p98 = pnand %p96, %p97
      %p99 = pneg %p98
      // Predicated region
      $region9: #{tpu_custom_call.1} parent=5 // pred_check
        _
      $region10: #{tpu_custom_call.1} parent=5 // pred_check_branch
        %101 = sbr.rel (%p98) target = $region12
      $region11: #{tpu_custom_call.1} parent=5 // pred_region
        %s102 = ssub.s32 %s15, 1
        // Predicated region
        $region13: #{tpu_custom_call.1} parent=11 // pred_check
          %p103 = pneg %p62
        $region14: #{tpu_custom_call.1} parent=11 // pred_check_branch
          %105 = sbr.rel (%p103) target = $region16
        $region15: #{tpu_custom_call.1} parent=11 // pred_region
          %107 = vsyncadd [#allocation6], 0
          %s108 = sshll.u32 %s1, 4
          %s109 = int_to_ptr.hbm [resolvable:$true] %s108
          %s110 = sshll.u32 [#allocation5], 4
          %s111 = int_to_ptr.vmem [resolvable:$true] %s110
          %116 = dma.hbm_to_vmem [thread:$0]  %s109, 3200, %s111, [#allocation6], 64, 64, 4
        $region16: #{tpu_custom_call.1} parent=11 // pred_fallthru
          _
      $region12: #{tpu_custom_call.1} parent=5 // pred_fallthru
        _
      %p117 = scmp.lt.s32.totalorder %s15, 2
      // Predicated region
      $region17: #{tpu_custom_call.1} parent=5 // pred_check
        %p118 = pneg %p117
      $region18: #{tpu_custom_call.1} parent=5 // pred_check_branch
        %120 = sbr.rel (%p118) target = $region20
      $region19: #{tpu_custom_call.1} parent=5 // pred_region
        // Predicated region
        $region21: #{tpu_custom_call.1} parent=19 // pred_check
          %p121 = pneg %p35
        $region22: #{tpu_custom_call.1} parent=19 // pred_check_branch
          %123 = sbr.rel (%p121) target = $region24
        $region23: #{tpu_custom_call.1} parent=19 // pred_region
          %s124 = sand.u32 %s25, 1
          %s125 = scalar_lea.sflag [#allocation3], %s124
          %s126 = sand.u32 %s25, 1
          %s127 = smul.addr %s126, 128
          %s128 = scalar_lea.vmem [#allocation2], %s127
          %s129 = smul.u32 16, %s15
          %131 = vsyncadd %s125, 0
          %s132 = smul.addr %s129, 8
          %s133 = scalar_lea.hbm %s0, %s132
          %s134 = sshll.u32 %s133, 4
          %s135 = int_to_ptr.hbm [resolvable:$true] %s134
          %s136 = sshll.u32 %s128, 4
          %s137 = int_to_ptr.vmem [resolvable:$true] %s136
          %142 = dma.hbm_to_vmem [thread:$0]  %s135, 2048, %s137, %s125, 128, 128, 8
        $region24: #{tpu_custom_call.1} parent=19 // pred_fallthru
          _
      $region20: #{tpu_custom_call.1} parent=5 // pred_fallthru
        _
      %p143 = scmp.le.s32.totalorder 1, %s15
      %p144 = scmp.lt.s32.totalorder %s15, 3
      %p145 = pnand %p143, %p144
      %p146 = pneg %p145
      // Predicated region
      $region25: #{tpu_custom_call.1} parent=5 // pred_check
        _
      $region26: #{tpu_custom_call.1} parent=5 // pred_check_branch
        %148 = sbr.rel (%p145) target = $region28
      $region27: #{tpu_custom_call.1} parent=5 // pred_region
        %s149 = ssub.s32 %s15, 1
        %s150 = sand.u32 %s28, 1
        %s151 = scalar_lea.sflag [#allocation3], %s150
        %s152 = sand.u32 %s28, 1
        %s153 = smul.addr %s152, 128
        %s154 = scalar_lea.vmem [#allocation2], %s153
        // Predicated region
        $region29: #{tpu_custom_call.1} parent=27 // pred_check
          %p155 = pneg %p41
        $region30: #{tpu_custom_call.1} parent=27 // pred_check_branch
          %157 = sbr.rel (%p155) target = $region32
        $region31: #{tpu_custom_call.1} parent=27 // pred_region
          %159 = dma.done %s151, 2048
        $region32: #{tpu_custom_call.1} parent=27 // pred_fallthru
          _
        // Predicated region
        $region33: #{tpu_custom_call.1} parent=27 // pred_check
          %p160 = pneg %p62
        $region34: #{tpu_custom_call.1} parent=27 // pred_check_branch
          %162 = sbr.rel (%p160) target = $region36
        $region35: #{tpu_custom_call.1} parent=27 // pred_region
          %164 = dma.done [#allocation6], 3200
        $region36: #{tpu_custom_call.1} parent=27 // pred_fallthru
          _
        %s165 = sand.u32 %s28, 1
        %s166 = scalar_lea.sflag [#allocation3], %s165
        %s167 = sand.u32 %s28, 1
        %s168 = smul.addr %s167, 128
        %s169 = scalar_lea.vmem [#allocation2], %s168
        %p170 = pneg %p41
        %p171 = pneg %p38
        %p172 = pneg %p62
        %p173 = pneg %p59
        %p174 = pneg %p88
        %p175 = pneg %p85
        %s176 = sand.u32 %s75, 1
        %s177 = scalar_lea.sflag [#allocation4], %s176
        %s178 = sand.u32 %s75, 1
        %s179 = smul.addr %s178, 128
        %s180 = scalar_lea.vmem [#allocation7], %s179
        %s181 = smul.u32 16, %s20
        %s182 = smul.u32 16, %s20
        %v183 = vld [vmem:[%s154] sm:$0xff]
        %v184 = vld [vmem:[%s154 + $0x8] sm:$0xff]
        %v185 = vld [vmem:[%s154 + $0x10] sm:$0xff]
        %v186 = vld [vmem:[%s154 + $0x18] sm:$0xff]
        %v187 = vld [vmem:[%s154 + $0x20] sm:$0xff]
        %v188 = vld [vmem:[%s154 + $0x28] sm:$0xff]
        %v189 = vld [vmem:[%s154 + $0x30] sm:$0xff]
        %v190 = vld [vmem:[%s154 + $0x38] sm:$0xff]
        %v191 = vld [vmem:[%s154 + $0x40] sm:$0xff]
        %v192 = vld [vmem:[%s154 + $0x48] sm:$0xff]
        %v193 = vld [vmem:[%s154 + $0x50] sm:$0xff]
        %v194 = vld [vmem:[%s154 + $0x58] sm:$0xff]
        %v195 = vld [vmem:[%s154 + $0x60] sm:$0xff]
        %v196 = vld [vmem:[%s154 + $0x68] sm:$0xff]
        %v197 = vld [vmem:[%s154 + $0x70] sm:$0xff]
        %v198 = vld [vmem:[%s154 + $0x78] sm:$0xff]
        %v199 = vpack.c.bf16 %v184, %v183
        %v200 = vpack.c.bf16 %v186, %v185
        %v201 = vpack.c.bf16 %v188, %v187
        %v202 = vpack.c.bf16 %v190, %v189
        %v203 = vpack.c.bf16 %v192, %v191
        %v204 = vpack.c.bf16 %v194, %v193
        %v205 = vpack.c.bf16 %v196, %v195
        %v206 = vpack.c.bf16 %v198, %v197
        %v207 = vld [vmem:[#allocation5] sm:$0xf]
        %v208 = vld [vmem:[#allocation5 + $0x4] sm:$0xf]
        %v209 = vld [vmem:[#allocation5 + $0x8] sm:$0xf]
        %v210 = vld [vmem:[#allocation5 + $0xc] sm:$0xf]
        %v211 = vld [vmem:[#allocation5 + $0x10] sm:$0xf]
        %v212 = vld [vmem:[#allocation5 + $0x14] sm:$0xf]
        %v213 = vld [vmem:[#allocation5 + $0x18] sm:$0xf]
        %v214 = vld [vmem:[#allocation5 + $0x1c] sm:$0xf]
        %v215 = vld [vmem:[#allocation5 + $0x20] sm:$0xf]
        %v216 = vld [vmem:[#allocation5 + $0x24] sm:$0xf]
        %v217 = vld [vmem:[#allocation5 + $0x28] sm:$0xf]
        %v218 = vld [vmem:[#allocation5 + $0x2c] sm:$0xf]
        %v219 = vld [vmem:[#allocation5 + $0x30] sm:$0xf]
        %v220 = vld [vmem:[#allocation5 + $0x34] sm:$0xf]
        %v221 = vld [vmem:[#allocation5 + $0x38] sm:$0xf]
        %v222 = vld [vmem:[#allocation5 + $0x3c] sm:$0xf]
        %v223 = vld [vmem:[#allocation5 + $0x40] sm:$0xf]
        %v224 = vld [vmem:[#allocation5 + $0x44] sm:$0xf]
        %v225 = vld [vmem:[#allocation5 + $0x48] sm:$0xf]
        %v226 = vld [vmem:[#allocation5 + $0x4c] sm:$0xf]
        %v227 = vld [vmem:[#allocation5 + $0x50] sm:$0xf]
        %v228 = vld [vmem:[#allocation5 + $0x54] sm:$0xf]
        %v229 = vld [vmem:[#allocation5 + $0x58] sm:$0xf]
        %v230 = vld [vmem:[#allocation5 + $0x5c] sm:$0xf]
        %v231 = vld [vmem:[#allocation5 + $0x60] sm:$0xf]
        %v232 = vld [vmem:[#allocation5 + $0x64] sm:$0xf]
        %v233 = vld [vmem:[#allocation5 + $0x68] sm:$0xf]
        %v234 = vld [vmem:[#allocation5 + $0x6c] sm:$0xf]
        %v235 = vld [vmem:[#allocation5 + $0x70] sm:$0xf]
        %v236 = vld [vmem:[#allocation5 + $0x74] sm:$0xf]
        %v237 = vld [vmem:[#allocation5 + $0x78] sm:$0xf]
        %v238 = vld [vmem:[#allocation5 + $0x7c] sm:$0xf]
        %v239 = vld [vmem:[#allocation5 + $0x80] sm:$0xf]
        %v240 = vld [vmem:[#allocation5 + $0x84] sm:$0xf]
        %v241 = vld [vmem:[#allocation5 + $0x88] sm:$0xf]
        %v242 = vld [vmem:[#allocation5 + $0x8c] sm:$0xf]
        %v243 = vld [vmem:[#allocation5 + $0x90] sm:$0xf]
        %v244 = vld [vmem:[#allocation5 + $0x94] sm:$0xf]
        %v245 = vld [vmem:[#allocation5 + $0x98] sm:$0xf]
        %v246 = vld [vmem:[#allocation5 + $0x9c] sm:$0xf]
        %v247 = vld [vmem:[#allocation5 + $0xa0] sm:$0xf]
        %v248 = vld [vmem:[#allocation5 + $0xa4] sm:$0xf]
        %v249 = vld [vmem:[#allocation5 + $0xa8] sm:$0xf]
        %v250 = vld [vmem:[#allocation5 + $0xac] sm:$0xf]
        %v251 = vld [vmem:[#allocation5 + $0xb0] sm:$0xf]
        %v252 = vld [vmem:[#allocation5 + $0xb4] sm:$0xf]
        %v253 = vld [vmem:[#allocation5 + $0xb8] sm:$0xf]
        %v254 = vld [vmem:[#allocation5 + $0xbc] sm:$0xf]
        %v255 = vld [vmem:[#allocation5 + $0xc0] sm:$0x1]
        %v256 = vunpack.c.l.bf16 %v255
        %v257 = vld [vmem:[#allocation5 + $0xc4] sm:$0x1]
        %v258 = vunpack.c.l.bf16 %v257
        %v275 = vunpack.c.l.b16 %v207
        %v276 = vunpack.c.l.b16 %v208
        %v277 = vunpack.c.l.b16 %v209
        %v278 = vunpack.c.l.b16 %v210
        %v279 = vunpack.c.l.b16 %v211
        %v280 = vunpack.c.l.b16 %v212
        %v281 = vunpack.c.l.b16 %v213
        %v282 = vunpack.c.l.b16 %v214
        %v283 = vunpack.c.l.b16 %v215
        %v284 = vunpack.c.l.b16 %v216
        %v285 = vunpack.c.l.b16 %v217
        %v286 = vunpack.c.l.b16 %v218
        %v287 = vunpack.c.l.b16 %v219
        %v288 = vunpack.c.l.b16 %v220
        %v289 = vunpack.c.l.b16 %v221
        %v290 = vunpack.c.l.b16 %v222
        %v291 = vpack.c.b16 %v276, %v275
        %v292 = vpack.c.b16 %v278, %v277
        %v293 = vpack.c.b16 %v280, %v279
        %v294 = vpack.c.b16 %v282, %v281
        %v295 = vpack.c.b16 %v284, %v283
        %v296 = vpack.c.b16 %v286, %v285
        %v297 = vpack.c.b16 %v288, %v287
        %v298 = vpack.c.b16 %v290, %v289
        %307 = vmatpush.bf16.msra.mxu0 %v298
        %308 = vmatpush.bf16.msra.mxu0 %v297
        %309 = vmatpush.bf16.msra.mxu0 %v296
        %310 = vmatpush.bf16.msra.mxu0 %v295
        %311 = vmatpush.bf16.msra.mxu0 %v294
        %312 = vmatpush.bf16.msra.mxu0 %v293
        %313 = vmatpush.bf16.msra.mxu0 %v292
        %314 = vmatpush.bf16.msra.mxu0 %v291
        %315 = vmatmul.bf16.gmra.mxu0 %v199
        %v316 = vpop.f32.mrf.mxu0
        %v317 = vadd.f32 0.0, %v316
        %v318 = vpop.f32.mrf.mxu0
        %v319 = vadd.f32 0.0, %v318
        %320 = vmatmul.bf16.gmra.mxu0 %v200
        %v321 = vpop.f32.mrf.mxu0
        %v322 = vadd.f32 0.0, %v321
        %v323 = vpop.f32.mrf.mxu0
        %v324 = vadd.f32 0.0, %v323
        %325 = vmatmul.bf16.gmra.mxu0 %v201
        %v326 = vpop.f32.mrf.mxu0
        %v327 = vadd.f32 0.0, %v326
        %v328 = vpop.f32.mrf.mxu0
        %v329 = vadd.f32 0.0, %v328
        %330 = vmatmul.bf16.gmra.mxu0 %v202
        %v331 = vpop.f32.mrf.mxu0
        %v332 = vadd.f32 0.0, %v331
        %v333 = vpop.f32.mrf.mxu0
        %v334 = vadd.f32 0.0, %v333
        %335 = vmatmul.bf16.gmra.mxu0 %v203
        %v336 = vpop.f32.mrf.mxu0
        %v337 = vadd.f32 0.0, %v336
        %v338 = vpop.f32.mrf.mxu0
        %v339 = vadd.f32 0.0, %v338
        %340 = vmatmul.bf16.gmra.mxu0 %v204
        %v341 = vpop.f32.mrf.mxu0
        %v342 = vadd.f32 0.0, %v341
        %v343 = vpop.f32.mrf.mxu0
        %v344 = vadd.f32 0.0, %v343
        %345 = vmatmul.bf16.gmra.mxu0 %v205
        %v346 = vpop.f32.mrf.mxu0
        %v347 = vadd.f32 0.0, %v346
        %v348 = vpop.f32.mrf.mxu0
        %v349 = vadd.f32 0.0, %v348
        %350 = vmatmul.bf16.gmra.mxu0 %v206
        %v351 = vpop.f32.mrf.mxu0
        %v352 = vadd.f32 0.0, %v351
        %v353 = vpop.f32.mrf.mxu0
        %v354 = vadd.f32 0.0, %v353
        %355 = vdwg.mxu0
        %v356 = vmax.f32 %v317, 0.0
        %v357 = vmax.f32 %v319, 0.0
        %v358 = vmax.f32 %v322, 0.0
        %v359 = vmax.f32 %v324, 0.0
        %v360 = vmax.f32 %v327, 0.0
        %v361 = vmax.f32 %v329, 0.0
        %v362 = vmax.f32 %v332, 0.0
        %v363 = vmax.f32 %v334, 0.0
        %v364 = vmax.f32 %v337, 0.0
        %v365 = vmax.f32 %v339, 0.0
        %v366 = vmax.f32 %v342, 0.0
        %v367 = vmax.f32 %v344, 0.0
        %v368 = vmax.f32 %v347, 0.0
        %v369 = vmax.f32 %v349, 0.0
        %v370 = vmax.f32 %v352, 0.0
        %v371 = vmax.f32 %v354, 0.0
        %v372 = vpack.c.bf16 %v357, %v356
        %v373 = vpack.c.bf16 %v359, %v358
        %v374 = vpack.c.bf16 %v361, %v360
        %v375 = vpack.c.bf16 %v363, %v362
        %v376 = vpack.c.bf16 %v365, %v364
        %v377 = vpack.c.bf16 %v367, %v366
        %v378 = vpack.c.bf16 %v369, %v368
        %v379 = vpack.c.bf16 %v371, %v370
        %v380 = vperm.slane %v256, 0
        %v397 = vunpack.c.l.b16 %v223
        %v398 = vunpack.c.l.b16 %v224
        %v399 = vunpack.c.l.b16 %v225
        %v400 = vunpack.c.l.b16 %v226
        %v401 = vunpack.c.l.b16 %v227
        %v402 = vunpack.c.l.b16 %v228
        %v403 = vunpack.c.l.b16 %v229
        %v404 = vunpack.c.l.b16 %v230
        %v405 = vunpack.c.l.b16 %v231
        %v406 = vunpack.c.l.b16 %v232
        %v407 = vunpack.c.l.b16 %v233
        %v408 = vunpack.c.l.b16 %v234
        %v409 = vunpack.c.l.b16 %v235
        %v410 = vunpack.c.l.b16 %v236
        %v411 = vunpack.c.l.b16 %v237
        %v412 = vunpack.c.l.b16 %v238
        %v413 = vpack.c.b16 %v398, %v397
        %v414 = vpack.c.b16 %v400, %v399
        %v415 = vpack.c.b16 %v402, %v401
        %v416 = vpack.c.b16 %v404, %v403
        %v417 = vpack.c.b16 %v406, %v405
        %v418 = vpack.c.b16 %v408, %v407
        %v419 = vpack.c.b16 %v410, %v409
        %v420 = vpack.c.b16 %v412, %v411
        %429 = vmatpush.bf16.msra.mxu0 %v420
        %430 = vmatpush.bf16.msra.mxu0 %v419
        %431 = vmatpush.bf16.msra.mxu0 %v418
        %432 = vmatpush.bf16.msra.mxu0 %v417
        %433 = vmatpush.bf16.msra.mxu0 %v416
        %434 = vmatpush.bf16.msra.mxu0 %v415
        %435 = vmatpush.bf16.msra.mxu0 %v414
        %436 = vmatpush.bf16.msra.mxu0 %v413
        %437 = vmatmul.bf16.gmra.mxu0 %v372
        %v438 = vpop.f32.mrf.mxu0
        %v439 = vadd.f32 %v380, %v438
        %v440 = vpop.f32.mrf.mxu0
        %v441 = vadd.f32 %v380, %v440
        %442 = vmatmul.bf16.gmra.mxu0 %v373
        %v443 = vpop.f32.mrf.mxu0
        %v444 = vadd.f32 %v380, %v443
        %v445 = vpop.f32.mrf.mxu0
        %v446 = vadd.f32 %v380, %v445
        %447 = vmatmul.bf16.gmra.mxu0 %v374
        %v448 = vpop.f32.mrf.mxu0
        %v449 = vadd.f32 %v380, %v448
        %v450 = vpop.f32.mrf.mxu0
        %v451 = vadd.f32 %v380, %v450
        %452 = vmatmul.bf16.gmra.mxu0 %v375
        %v453 = vpop.f32.mrf.mxu0
        %v454 = vadd.f32 %v380, %v453
        %v455 = vpop.f32.mrf.mxu0
        %v456 = vadd.f32 %v380, %v455
        %457 = vmatmul.bf16.gmra.mxu0 %v376
        %v458 = vpop.f32.mrf.mxu0
        %v459 = vadd.f32 %v380, %v458
        %v460 = vpop.f32.mrf.mxu0
        %v461 = vadd.f32 %v380, %v460
        %462 = vmatmul.bf16.gmra.mxu0 %v377
        %v463 = vpop.f32.mrf.mxu0
        %v464 = vadd.f32 %v380, %v463
        %v465 = vpop.f32.mrf.mxu0
        %v466 = vadd.f32 %v380, %v465
        %467 = vmatmul.bf16.gmra.mxu0 %v378
        %v468 = vpop.f32.mrf.mxu0
        %v469 = vadd.f32 %v380, %v468
        %v470 = vpop.f32.mrf.mxu0
        %v471 = vadd.f32 %v380, %v470
        %472 = vmatmul.bf16.gmra.mxu0 %v379
        %v473 = vpop.f32.mrf.mxu0
        %v474 = vadd.f32 %v380, %v473
        %v475 = vpop.f32.mrf.mxu0
        %v476 = vadd.f32 %v380, %v475
        %477 = vdwg.mxu0
        %v478 = vmax.f32 %v439, 0.0
        %v479 = vmax.f32 %v441, 0.0
        %v480 = vmax.f32 %v444, 0.0
        %v481 = vmax.f32 %v446, 0.0
        %v482 = vmax.f32 %v449, 0.0
        %v483 = vmax.f32 %v451, 0.0
        %v484 = vmax.f32 %v454, 0.0
        %v485 = vmax.f32 %v456, 0.0
        %v486 = vmax.f32 %v459, 0.0
        %v487 = vmax.f32 %v461, 0.0
        %v488 = vmax.f32 %v464, 0.0
        %v489 = vmax.f32 %v466, 0.0
        %v490 = vmax.f32 %v469, 0.0
        %v491 = vmax.f32 %v471, 0.0
        %v492 = vmax.f32 %v474, 0.0
        %v493 = vmax.f32 %v476, 0.0
        %v494 = vpack.c.bf16 %v479, %v478
        %v495 = vpack.c.bf16 %v481, %v480
        %v496 = vpack.c.bf16 %v483, %v482
        %v497 = vpack.c.bf16 %v485, %v484
        %v498 = vpack.c.bf16 %v487, %v486
        %v499 = vpack.c.bf16 %v489, %v488
        %v500 = vpack.c.bf16 %v491, %v490
        %v501 = vpack.c.bf16 %v493, %v492
        %v502 = vperm.slane %v258, 0
        %v519 = vunpack.c.l.b16 %v239
        %v520 = vunpack.c.l.b16 %v240
        %v521 = vunpack.c.l.b16 %v241
        %v522 = vunpack.c.l.b16 %v242
        %v523 = vunpack.c.l.b16 %v243
        %v524 = vunpack.c.l.b16 %v244
        %v525 = vunpack.c.l.b16 %v245
        %v526 = vunpack.c.l.b16 %v246
        %v527 = vunpack.c.l.b16 %v247
        %v528 = vunpack.c.l.b16 %v248
        %v529 = vunpack.c.l.b16 %v249
        %v530 = vunpack.c.l.b16 %v250
        %v531 = vunpack.c.l.b16 %v251
        %v532 = vunpack.c.l.b16 %v252
        %v533 = vunpack.c.l.b16 %v253
        %v534 = vunpack.c.l.b16 %v254
        %v535 = vpack.c.b16 %v520, %v519
        %v536 = vpack.c.b16 %v522, %v521
        %v537 = vpack.c.b16 %v524, %v523
        %v538 = vpack.c.b16 %v526, %v525
        %v539 = vpack.c.b16 %v528, %v527
        %v540 = vpack.c.b16 %v530, %v529
        %v541 = vpack.c.b16 %v532, %v531
        %v542 = vpack.c.b16 %v534, %v533
        %551 = vmatpush.bf16.msra.mxu0 %v542
        %552 = vmatpush.bf16.msra.mxu0 %v541
        %553 = vmatpush.bf16.msra.mxu0 %v540
        %554 = vmatpush.bf16.msra.mxu0 %v539
        %555 = vmatpush.bf16.msra.mxu0 %v538
        %556 = vmatpush.bf16.msra.mxu0 %v537
        %557 = vmatpush.bf16.msra.mxu0 %v536
        %558 = vmatpush.bf16.msra.mxu0 %v535
        %559 = vmatmul.bf16.gmra.mxu0 %v494
        %v560 = vpop.f32.mrf.mxu0
        %v561 = vadd.f32 %v502, %v560
        %v562 = vpop.f32.mrf.mxu0
        %v563 = vadd.f32 %v502, %v562
        %564 = vmatmul.bf16.gmra.mxu0 %v495
        %v565 = vpop.f32.mrf.mxu0
        %v566 = vadd.f32 %v502, %v565
        %v567 = vpop.f32.mrf.mxu0
        %v568 = vadd.f32 %v502, %v567
        %569 = vmatmul.bf16.gmra.mxu0 %v496
        %v570 = vpop.f32.mrf.mxu0
        %v571 = vadd.f32 %v502, %v570
        %v572 = vpop.f32.mrf.mxu0
        %v573 = vadd.f32 %v502, %v572
        %574 = vmatmul.bf16.gmra.mxu0 %v497
        %v575 = vpop.f32.mrf.mxu0
        %v576 = vadd.f32 %v502, %v575
        %v577 = vpop.f32.mrf.mxu0
        %v578 = vadd.f32 %v502, %v577
        %579 = vmatmul.bf16.gmra.mxu0 %v498
        %v580 = vpop.f32.mrf.mxu0
        %v581 = vadd.f32 %v502, %v580
        %v582 = vpop.f32.mrf.mxu0
        %v583 = vadd.f32 %v502, %v582
        %584 = vmatmul.bf16.gmra.mxu0 %v499
        %v585 = vpop.f32.mrf.mxu0
        %v586 = vadd.f32 %v502, %v585
        %v587 = vpop.f32.mrf.mxu0
        %v588 = vadd.f32 %v502, %v587
        %589 = vmatmul.bf16.gmra.mxu0 %v500
        %v590 = vpop.f32.mrf.mxu0
        %v591 = vadd.f32 %v502, %v590
        %v592 = vpop.f32.mrf.mxu0
        %v593 = vadd.f32 %v502, %v592
        %594 = vmatmul.bf16.gmra.mxu0 %v501
        %v595 = vpop.f32.mrf.mxu0
        %v596 = vadd.f32 %v502, %v595
        %v597 = vpop.f32.mrf.mxu0
        %v598 = vadd.f32 %v502, %v597
        %599 = vdwg.mxu0
        %600 = vst [vmem:[%s180] sm:$0xff] %v561
        %601 = vst [vmem:[%s180 + $0x8] sm:$0xff] %v563
        %602 = vst [vmem:[%s180 + $0x10] sm:$0xff] %v566
        %603 = vst [vmem:[%s180 + $0x18] sm:$0xff] %v568
        %604 = vst [vmem:[%s180 + $0x20] sm:$0xff] %v571
        %605 = vst [vmem:[%s180 + $0x28] sm:$0xff] %v573
        %606 = vst [vmem:[%s180 + $0x30] sm:$0xff] %v576
        %607 = vst [vmem:[%s180 + $0x38] sm:$0xff] %v578
        %608 = vst [vmem:[%s180 + $0x40] sm:$0xff] %v581
        %609 = vst [vmem:[%s180 + $0x48] sm:$0xff] %v583
        %610 = vst [vmem:[%s180 + $0x50] sm:$0xff] %v586
        %611 = vst [vmem:[%s180 + $0x58] sm:$0xff] %v588
        %612 = vst [vmem:[%s180 + $0x60] sm:$0xff] %v591
        %613 = vst [vmem:[%s180 + $0x68] sm:$0xff] %v593
        %614 = vst [vmem:[%s180 + $0x70] sm:$0xff] %v596
        %615 = vst [vmem:[%s180 + $0x78] sm:$0xff] %v598
        %s616 = sand.u32 %s75, 1
        %s617 = scalar_lea.sflag [#allocation4], %s616
        %s618 = sand.u32 %s75, 1
        %s619 = smul.addr %s618, 128
        %s620 = scalar_lea.vmem [#allocation7], %s619
        // Predicated region
        $region37: #{tpu_custom_call.1} parent=27 // pred_check
          %p621 = pneg %p85
        $region38: #{tpu_custom_call.1} parent=27 // pred_check_branch
          %623 = sbr.rel (%p621) target = $region40
        $region39: #{tpu_custom_call.1} parent=27 // pred_region
          %s624 = smul.u32 16, %s20
          %626 = vsyncadd %s617, 0
          %s627 = smul.addr %s624, 8
          %s628 = scalar_lea.hbm %s2, %s627
          %s629 = sshll.u32 %s620, 4
          %s630 = int_to_ptr.vmem [resolvable:$true] %s629
          %s631 = sshll.u32 %s628, 4
          %s632 = int_to_ptr.hbm [resolvable:$true] %s631
          %637 = dma.vmem_to_hbm [thread:$0]  %s630, 2048, %s632, %s617, 128, 128, 8
        $region40: #{tpu_custom_call.1} parent=27 // pred_fallthru
          _
      $region28: #{tpu_custom_call.1} parent=5 // pred_fallthru
        _
      %p638 = scmp.le.s32.totalorder 2, %s15
      // Predicated region
      $region41: #{tpu_custom_call.1} parent=5 // pred_check
        %p639 = pneg %p638
      $region42: #{tpu_custom_call.1} parent=5 // pred_check_branch
        %641 = sbr.rel (%p639) target = $region44
      $region43: #{tpu_custom_call.1} parent=5 // pred_region
        %s642 = ssub.s32 %s15, 2
        // Predicated region
        $region45: #{tpu_custom_call.1} parent=43 // pred_check
          %p643 = pneg %p91
        $region46: #{tpu_custom_call.1} parent=43 // pred_check_branch
          %645 = sbr.rel (%p643) target = $region48
        $region47: #{tpu_custom_call.1} parent=43 // pred_region
          %s646 = sand.u32 %s76, 1
          %s647 = scalar_lea.sflag [#allocation4], %s646
          %s648 = sand.u32 %s76, 1
          %s649 = smul.addr %s648, 128
          %s650 = scalar_lea.vmem [#allocation7], %s649
          %652 = dma.done %s647, 2048
        $region48: #{tpu_custom_call.1} parent=43 // pred_fallthru
          _
      $region44: #{tpu_custom_call.1} parent=5 // pred_fallthru
        _
    $region6: #{tpu_custom_call.1} parent=1 // loop_footer
      %s19 = sadd.s32 1, %s15
    $region7: #{tpu_custom_call.1} parent=1 // loop_footer_branch
      %14 = sbr.rel target = $region3
    $region8: #{tpu_custom_call.1} parent=1 // loop_exit
      _
    %653 = vsyncpa [#allocation3], 1
    %s654 = scalar_lea.sflag [#allocation3], 1
    %655 = vsyncpa %s654, 1
    %656 = vsyncpa [#allocation6], 1
    %657 = vsyncpa [#allocation4], 1
    %s658 = scalar_lea.sflag [#allocation4], 1
    %659 = vsyncpa %s658, 1

</llo_original>
